<compile_context>
chip_gen: v7x
topology: tpu7x:2x2x1
jax: 0.10.0
libtpu: 0.0.40
codegen_flags: <defaults>
</compile_context>

<pallas_src>
import functools
from math import gcd

import jax
import jax.numpy as jnp
from jax.experimental import pallas as pl
from jax.experimental.pallas import tpu as pltpu


# ----------------------------------------------------------------------------
# Kernel body: Linear -> SiLU -> Linear on one (lane-packed) row tile.
# ----------------------------------------------------------------------------
def _mlp_kernel(x_ref, w1_ref, b1_ref, w2_ref, b2_ref, o_ref):
    """x_ref : (tm, Kin)    w1_ref : (Kin, Kout)   b1_ref : (1, Kout)
       w2_ref: (Kout, Kout) b2_ref : (1, Kout)     o_ref  : (tm, Kout)"""
    x = x_ref[...]
    # Linear 1 (MXU, f32 accumulation).
    h = jnp.dot(x, w1_ref[...], preferred_element_type=jnp.float32) + b1_ref[...]
    # SiLU in f32 (sigmoid lands in the EUP slot, free under the DMA-bound roof).
    h = h * jax.nn.sigmoid(h)
    # Linear 2 (cast the f32 accumulator back to the streamed weight dtype).
    y = jnp.dot(h.astype(w2_ref.dtype), w2_ref[...],
                preferred_element_type=jnp.float32) + b2_ref[...]
    o_ref[...] = y.astype(o_ref.dtype)


# ----------------------------------------------------------------------------
# Helpers.
# ----------------------------------------------------------------------------
def _round_up(x, m):
    return ((x + m - 1) // m) * m


def _block_diag(w, pack):
    """(I, O) -> (pack*I, pack*O) with `w` repeated on the diagonal blocks."""
    i, o = w.shape
    eye = jnp.eye(pack, dtype=w.dtype)
    return jnp.einsum("pq,io->piqo", eye, w).reshape(pack * i, pack * o)


def _pick_pack(hand_feat_dim, feat_dim, itemsize):
    """Smallest pack so both pack*hand_feat_dim and pack*feat_dim are 128-mult,
    falling back (weight-size capped) to output-only density, then to 1."""
    def need(d):
        return 128 // gcd(d, 128)

    p_out = need(feat_dim)
    p_in = need(hand_feat_dim)
    p_both = p_out * p_in // gcd(p_out, p_in)          # lcm
    for p in (p_both, p_out, 1):
        w_bytes = (p * hand_feat_dim * p * feat_dim + (p * feat_dim) ** 2) * itemsize
        if p <= 32 and w_bytes <= (4 << 20):
            return p
    return 1


_ROW_ALIGN = 16           # packed-row multiple (covers bf16 sublane packing)
_SPLIT_THRESHOLD = 64     # packed rows above which we force >= 2 grid steps
_MAX_TILE_ROWS = 8192     # hard cap on packed rows per grid step
_VMEM_BLOCK_BUDGET = 24 << 20   # budget for per-step blocks + intermediates


def _choose_tile(mp, tmp_cap, row_align):
    """Pick packed-row tile so steps are big AND the grid has an even number
    of >= 2 steps whenever there is enough work (v7x megacore balance)."""
    tmp_cap = max(row_align, tmp_cap)
    if mp <= tmp_cap:
        if mp >= _SPLIT_THRESHOLD:
            return min(mp, _round_up(pl.cdiv(mp, 2), row_align))
        return mp                      # tiny input: single full-array block
    steps = pl.cdiv(mp, tmp_cap)
    if steps % 2:
        steps += 1                     # balance across v7x's two TensorCores
    return min(mp, _round_up(pl.cdiv(mp, steps), row_align))


# ----------------------------------------------------------------------------
# Wrapper.
# ----------------------------------------------------------------------------
@functools.partial(jax.jit, static_argnames=("feat_dim", "stream_dtype"))
def hand_pose_embedder(poses, w1, b1, w2, b2, *, feat_dim, stream_dtype=None):
    """poses: (B, S, hand_feat_dim) -> (B, S, feat_dim).

    stream_dtype: optional dtype (e.g. jnp.bfloat16) used for streaming
    activations/weights through HBM; accumulation stays f32 either way.
    """
    B, S, hand_feat_dim = poses.shape
    M = B * S

    if stream_dtype is not None:
        poses = poses.astype(stream_dtype)
        w1 = w1.astype(stream_dtype)
        b1 = b1.astype(stream_dtype)
        w2 = w2.astype(stream_dtype)
        b2 = b2.astype(stream_dtype)
    itemsize = jnp.dtype(poses.dtype).itemsize

    # ---- lane packing: fold rows so BOTH last dims become 128-multiples.
    pack = _pick_pack(hand_feat_dim, feat_dim, itemsize)

    # Pad rows so M is a multiple of pack (keeps packing active; padding is
    # sliced off after the call).
    M_pad = _round_up(M, pack)
    x_flat = poses.reshape(M, hand_feat_dim)
    if M_pad != M:
        x_flat = jnp.concatenate(
            [x_flat, jnp.zeros((M_pad - M, hand_feat_dim), x_flat.dtype)], axis=0)

    Mp = M_pad // pack
    kin = pack * hand_feat_dim       # packed input feature width
    kout = pack * feat_dim           # packed output feature width

    # Pure view of the same contiguous bytes (free under jit).
    x2d = x_flat.reshape(Mp, kin)

    if pack > 1:
        w1k = _block_diag(w1, pack)                  # (kin, kout), block-diag
        w2k = _block_diag(w2, pack)                  # (kout, kout), block-diag
        b1k = jnp.tile(b1, pack).reshape(1, kout)
        b2k = jnp.tile(b2, pack).reshape(1, kout)
    else:
        w1k, w2k = w1, w2
        b1k = b1.reshape(1, kout)
        b2k = b2.reshape(1, kout)

    # ---- row tiling (in packed rows) from a VMEM budget.
    lane_kin = _round_up(kin, 128)
    lane_kout = _round_up(kout, 128)
    w_bytes = (lane_kin * lane_kout + lane_kout * lane_kout + 2 * lane_kout) * itemsize
    # per packed row: x (double-buffered) + out (double-buffered) + f32 h & y.
    per_row = 2 * lane_kin * itemsize + 2 * lane_kout * itemsize + 2 * lane_kout * 4
    tmp_cap = (_VMEM_BLOCK_BUDGET - 2 * w_bytes) // per_row
    tmp_cap = max(_ROW_ALIGN, (tmp_cap // _ROW_ALIGN) * _ROW_ALIGN)
    tmp_cap = min(tmp_cap, _MAX_TILE_ROWS)

    tmp = _choose_tile(Mp, tmp_cap, _ROW_ALIGN)
    grid = (pl.cdiv(Mp, tmp),)

    # Raise the scoped-VMEM limit explicitly (v5e defaults to 16 MiB); keep the
    # request comfortably under v7x's 64 MiB physical VMEM.
    vmem_est = 2 * w_bytes + tmp * per_row + (2 << 20)
    vmem_limit = int(min(max(vmem_est + (8 << 20), 32 << 20), 56 << 20))

    # Advisory cost estimate for XLA scheduling (logical op cost).
    cost = pl.CostEstimate(
        flops=int(2 * M * hand_feat_dim * feat_dim
                  + 2 * M * feat_dim * feat_dim + 4 * M * feat_dim),
        transcendentals=int(M * feat_dim),
        bytes_accessed=int(M * hand_feat_dim * itemsize
                           + M * feat_dim * itemsize + w_bytes),
    )

    out = pl.pallas_call(
        _mlp_kernel,
        out_shape=jax.ShapeDtypeStruct((Mp, kout), poses.dtype),
        grid_spec=pltpu.PrefetchScalarGridSpec(
            num_scalar_prefetch=0,
            grid=grid,
            in_specs=[
                pl.BlockSpec((tmp, kin), lambda i: (i, 0)),
                # Loop-invariant weights/biases: constant-index blocks
                # (DMA'd once, resident across grid steps).
                pl.BlockSpec((kin, kout), lambda i: (0, 0)),
                pl.BlockSpec((1, kout), lambda i: (0, 0)),
                pl.BlockSpec((kout, kout), lambda i: (0, 0)),
                pl.BlockSpec((1, kout), lambda i: (0, 0)),
            ],
            out_specs=pl.BlockSpec((tmp, kout), lambda i: (i, 0)),
        ),
        compiler_params=pltpu.CompilerParams(
            dimension_semantics=("parallel",),
            vmem_limit_bytes=vmem_limit),
        cost_estimate=cost,
    )(x2d, w1k, b1k, w2k, b2k)

    # Unpack, drop padded rows; torch: .reshape(poses.shape[0], -1, feat_dim).
    out = out.reshape(M_pad, feat_dim)[:M]
    return out.reshape(B, -1, feat_dim)


def _reference(poses, w1, b1, w2, b2, feat_dim):
    h = poses @ w1 + b1
    h = h * jax.nn.sigmoid(h)
    y = h @ w2 + b2
    return y.reshape(poses.shape[0], -1, feat_dim)


# TODO(synk): pos_encoder is stored on the torch module but never used in
# forward(), so it is intentionally not modeled here.

if __name__ == "__main__":
    # Small, module-consistent shapes.
    B, S = 2, 8
    hand_feat_dim = 48     # input pose feature dim
    feat_dim = 32          # embedding dim

    key = jax.random.PRNGKey(0)
    k_poses, k_w1, k_b1, k_w2, k_b2 = jax.random.split(key, 5)

    poses = jax.random.normal(k_poses, (B, S, hand_feat_dim), dtype=jnp.float32)

    # Deterministic synthetic parameters (stored as (in, out) = torch weight^T).
    w1 = jax.random.normal(k_w1, (hand_feat_dim, feat_dim), jnp.float32) * 0.05
    b1 = jax.random.normal(k_b1, (feat_dim,), jnp.float32) * 0.01
    w2 = jax.random.normal(k_w2, (feat_dim, feat_dim), jnp.float32) * 0.05
    b2 = jax.random.normal(k_b2, (feat_dim,), jnp.float32) * 0.01

    ref = _reference(poses, w1, b1, w2, b2, feat_dim)

    # f32 streaming path (exact match with the reference).
    out = jax.block_until_ready(
        hand_pose_embedder(poses, w1, b1, w2, b2, feat_dim=feat_dim))
    assert out.shape == (B, S, feat_dim), out.shape
    assert jnp.allclose(out, ref, atol=1e-5, rtol=1e-5), float(
        jnp.max(jnp.abs(out - ref)))

    # bf16 streaming path (bandwidth-optimized; looser tolerance expected).
    out_bf16 = jax.block_until_ready(
        hand_pose_embedder(poses, w1, b1, w2, b2, feat_dim=feat_dim,
                           stream_dtype=jnp.bfloat16))
    assert out_bf16.shape == (B, S, feat_dim), out_bf16.shape
    assert jnp.allclose(out_bf16.astype(jnp.float32), ref,
                        atol=5e-2, rtol=5e-2), float(
        jnp.max(jnp.abs(out_bf16.astype(jnp.float32) - ref)))

    # Row-padding path: M = 2*7 = 14 is not a multiple of pack=8.
    poses2 = jax.random.normal(k_poses, (B, 7, hand_feat_dim), jnp.float32)
    ref2 = _reference(poses2, w1, b1, w2, b2, feat_dim)
    out2 = jax.block_until_ready(
        hand_pose_embedder(poses2, w1, b1, w2, b2, feat_dim=feat_dim))
    assert out2.shape == (B, 7, feat_dim), out2.shape
    assert jnp.allclose(out2, ref2, atol=1e-5, rtol=1e-5), float(
        jnp.max(jnp.abs(out2 - ref2)))

    print("KERNEL_OK")
</pallas_src>

<mosaic_0001>
module attributes {stable_mosaic.version = 11 : i64} {
  func.func @_mlp_kernel(%arg0: i32, %arg1: memref<2x384xf32, #tpu.memory_space<vmem>>, %arg2: memref<384x256xf32, #tpu.memory_space<vmem>>, %arg3: memref<1x256xf32, #tpu.memory_space<vmem>>, %arg4: memref<256x256xf32, #tpu.memory_space<vmem>>, %arg5: memref<1x256xf32, #tpu.memory_space<vmem>>, %arg6: memref<2x256xf32, #tpu.memory_space<vmem>>) attributes {dimension_semantics = [#tpu.dimension_semantics<parallel>], iteration_bounds = array<i64: 1>, scalar_prefetch = 0 : i64, scratch_operands = 0 : i64, tpu.core_type = #tpu.core_type<tc>, window_params = [{transform_indices = @transform_0, window_bounds = array<i64: 2, 384>}, {pipeline_mode = #tpu.pipeline_mode<synchronous>, transform_indices = @transform_1, window_bounds = array<i64: 384, 256>}, {pipeline_mode = #tpu.pipeline_mode<synchronous>, transform_indices = @transform_2, window_bounds = array<i64: 1, 256>}, {pipeline_mode = #tpu.pipeline_mode<synchronous>, transform_indices = @transform_3, window_bounds = array<i64: 256, 256>}, {pipeline_mode = #tpu.pipeline_mode<synchronous>, transform_indices = @transform_4, window_bounds = array<i64: 1, 256>}, {transform_indices = @transform_5, window_bounds = array<i64: 2, 256>}]} {
    %c0 = arith.constant 0 : index
    %c0_0 = arith.constant 0 : index
    %0 = vector.load %arg1[%c0, %c0_0] : memref<2x384xf32, #tpu.memory_space<vmem>>, vector<2x384xf32>
    %c0_1 = arith.constant 0 : index
    %c0_2 = arith.constant 0 : index
    %1 = vector.load %arg2[%c0_1, %c0_2] : memref<384x256xf32, #tpu.memory_space<vmem>>, vector<384x256xf32>
    %cst = arith.constant dense<0.000000e+00> : vector<2x256xf32>
    %2 = tpu.matmul %0, %1, %cst {dimension_numbers = #tpu.dot_dimension_numbers<[1], [0], [0], [1], [0, 0, 1, 1], [], []>} : vector<2x384xf32>, vector<384x256xf32>, vector<2x256xf32> -> vector<2x256xf32>
    %c0_3 = arith.constant 0 : index
    %c0_4 = arith.constant 0 : index
    %3 = vector.load %arg3[%c0_3, %c0_4] : memref<1x256xf32, #tpu.memory_space<vmem>>, vector<1x256xf32>
    %4 = vector.broadcast %3 : vector<1x256xf32> to vector<2x256xf32>
    %5 = arith.addf %2, %4 : vector<2x256xf32>
    %6 = arith.negf %5 : vector<2x256xf32>
    %7 = math.exp %6 : vector<2x256xf32>
    %cst_5 = arith.constant 1.000000e+00 : f32
    %8 = vector.broadcast %cst_5 : f32 to vector<2x256xf32>
    %9 = arith.addf %8, %7 : vector<2x256xf32>
    %10 = arith.divf %8, %9 : vector<2x256xf32>
    %11 = arith.mulf %5, %10 : vector<2x256xf32>
    %c0_6 = arith.constant 0 : index
    %c0_7 = arith.constant 0 : index
    %12 = vector.load %arg4[%c0_6, %c0_7] : memref<256x256xf32, #tpu.memory_space<vmem>>, vector<256x256xf32>
    %cst_8 = arith.constant dense<0.000000e+00> : vector<2x256xf32>
    %13 = tpu.matmul %11, %12, %cst_8 {dimension_numbers = #tpu.dot_dimension_numbers<[1], [0], [0], [1], [0, 0, 1, 1], [], []>} : vector<2x256xf32>, vector<256x256xf32>, vector<2x256xf32> -> vector<2x256xf32>
    %c0_9 = arith.constant 0 : index
    %c0_10 = arith.constant 0 : index
    %14 = vector.load %arg5[%c0_9, %c0_10] : memref<1x256xf32, #tpu.memory_space<vmem>>, vector<1x256xf32>
    %15 = vector.broadcast %14 : vector<1x256xf32> to vector<2x256xf32>
    %16 = arith.addf %13, %15 : vector<2x256xf32>
    %c0_11 = arith.constant 0 : index
    %c0_12 = arith.constant 0 : index
    %17 = vector.load %arg6[%c0_11, %c0_12] : memref<2x256xf32, #tpu.memory_space<vmem>>, vector<2x256xf32>
    tpu.vector_store %arg6[%c0_11, %c0_12], %16 {strides = array<i32>} : memref<2x256xf32, #tpu.memory_space<vmem>>, vector<2x256xf32>,
    return
  }
  func.func @transform_0(%arg0: i32) -> (i32, i32) {
    %c0_i32 = arith.constant 0 : i32
    %c0_i32_0 = arith.constant 0 : i32
    return %arg0, %c0_i32 : i32, i32
  }
  func.func @transform_1(%arg0: i32) -> (i32, i32) {
    %c0_i32 = arith.constant 0 : i32
    %c0_i32_0 = arith.constant 0 : i32
    %c0_i32_1 = arith.constant 0 : i32
    return %c0_i32, %c0_i32_0 : i32, i32
  }
  func.func @transform_2(%arg0: i32) -> (i32, i32) {
    %c0_i32 = arith.constant 0 : i32
    %c0_i32_0 = arith.constant 0 : i32
    %c0_i32_1 = arith.constant 0 : i32
    return %c0_i32, %c0_i32_0 : i32, i32
  }
  func.func @transform_3(%arg0: i32) -> (i32, i32) {
    %c0_i32 = arith.constant 0 : i32
    %c0_i32_0 = arith.constant 0 : i32
    %c0_i32_1 = arith.constant 0 : i32
    return %c0_i32, %c0_i32_0 : i32, i32
  }
  func.func @transform_4(%arg0: i32) -> (i32, i32) {
    %c0_i32 = arith.constant 0 : i32
    %c0_i32_0 = arith.constant 0 : i32
    %c0_i32_1 = arith.constant 0 : i32
    return %c0_i32, %c0_i32_0 : i32, i32
  }
  func.func @transform_5(%arg0: i32) -> (i32, i32) {
    %c0_i32 = arith.constant 0 : i32
    %c0_i32_0 = arith.constant 0 : i32
    return %arg0, %c0_i32 : i32, i32
  }
}

</mosaic_0001>

<llo_original>
// kernel: tile.13
$region0: #{tile.13}
  #allocation0 [shape = 's32[1]{0}', space=sflag, size = 0x4, scoped, tag = 'scoped memory for tile.13']
  %s0 = inlined_call_operand.vmem [shape: f32[32], index: 0, kind: input, shape index: {}]
  %s1 = inlined_call_operand.vmem [shape: f32[8,32], index: 1, kind: output, shape index: {}]
  // Predicated region
  $region2: #{tile.13} parent=0 // pred_check
    _
  $region3: #{tile.13} parent=0 // pred_check_branch
    %3 = sbr.rel (0) target = $region5
  $region4: #{tile.13} parent=0 // pred_region
    _
  $region5: #{tile.13} parent=0 // pred_fallthru
    _
  %v4 = vld [vmem:[%s0] ss:$0 sm:$0xff]
  %5 = vst [vmem:[%s1] sm:$0xff] %v4

// kernel: tile.14
$region0: #{tile.14}
  %s0 = inlined_call_operand.vmem [shape: f32[8,32], index: 0, kind: input, shape index: {}]
  %s1 = inlined_call_operand.vmem [shape: f32[1,256], index: 1, kind: output, shape index: {}]
  $region1: #{tile.14} parent=0
    #allocation0 [shape = 'u8[8192]{0}', space=vmem, size = 0x2000, scoped, tag = 'scoped mem for output reshape']
    %s2 = smov 3
    %v3 = vld [vmem:[%s0] ss:$4 sm:%s2]
    %vm4 = vcmask 261120
    %5 = vst.msk [vmem:[#allocation0] ss:$8 sm:$0x3] %vm4, %v3
    %s6 = scalar_lea.vmem %s0, 3
    %s7 = smov 3
    %v8 = vld [vmem:[%s6] ss:$4 sm:%s7]
    %9 = vrot.lane.b32.xlu0 %v8, 96
    %v10 = vpop.permute.xlu0 %9
    %vm11 = vcmask 1048320
    %12 = vst.msk [vmem:[#allocation0] ss:$8 sm:$0x3] %vm11, %v10
    %s13 = scalar_lea.vmem %s0, 2
    %s14 = smov 3
    %v15 = vld [vmem:[%s13] ss:$4 sm:%s14]
    %16 = vrot.lane.b32.xlu0 %v15, 64
    %v17 = vpop.permute.xlu0 %16
    %vm18 = vcmask 785920
    %19 = vst.msk [vmem:[#allocation0] ss:$8 sm:$0x3] %vm18, %v17
    %s20 = scalar_lea.vmem %s0, 1
    %s21 = smov 3
    %v22 = vld [vmem:[%s20] ss:$4 sm:%s21]
    %23 = vrot.lane.b32.xlu0 %v22, 32
    %v24 = vpop.permute.xlu0 %23
    %vm25 = vcmask 523520
    %26 = vst.msk [vmem:[#allocation0] ss:$8 sm:$0x3] %vm25, %v24
    %s28 = sshllo.u32 0, 1
    %v30 = vld [vmem:[#allocation0] sm:%s28]
    %s31 = sshllo.u32 0, 1
    %32 = vst [vmem:[%s1] sm:%s31] %v30
    %s33 = scalar_lea.vmem [#allocation0], 8
    %v34 = vld [vmem:[%s33] sm:%s28]
    %s35 = sshllo.u32 0, 1
    %s36 = scalar_lea.vmem %s1, 1
    %37 = vst [vmem:[%s36] sm:%s35] %v34

// kernel: hand_pose_embedder.1
$region0: #{hand_pose_embedder.1}
  #allocation0 [shape = 'u32[]', space=smem, size = 0x4, offset = 0x4, fixed_abs, tag = 'smem constant byte address 0x4 - core index']
  #allocation1 [shape = 'u32[144,128]{1,0:T(1,128)}', space=vmem, size = 0x12000, scoped, tag = 'internal scratch']
  %s0 = inlined_call_operand.vmem [shape: f32[2,384], index: 0, kind: input, shape index: {}]
  %s1 = inlined_call_operand.vmem [shape: f32[384,256], index: 1, kind: input, shape index: {}]
  %s2 = inlined_call_operand.vmem [shape: f32[1,256], index: 2, kind: input, shape index: {}]
  %s3 = inlined_call_operand.vmem [shape: f32[256,256], index: 3, kind: input, shape index: {}]
  %s4 = inlined_call_operand.vmem [shape: f32[1,256], index: 4, kind: input, shape index: {}]
  %s5 = inlined_call_operand.vmem [shape: f32[2,256], index: 5, kind: output, shape index: {}]
  %s6 = sld [smem:[#allocation0]]
  $region30: #{hand_pose_embedder.1} parent=0
    _
  %s8 = ssub.s32 1, %s6
  %s9 = scalar_select 0, %s8, %s6
  // Predicated region
  $region2: #{hand_pose_embedder.1} parent=0 // pred_check
    _
  $region3: #{hand_pose_embedder.1} parent=0 // pred_check_branch
    %11 = sbr.rel (0) target = $region5
  $region4: #{hand_pose_embedder.1} parent=0 // pred_region
    _
  $region5: #{hand_pose_embedder.1} parent=0 // pred_fallthru
    _
  // Predicated region
  $region6: #{hand_pose_embedder.1} parent=0 // pred_check
    _
  $region7: #{hand_pose_embedder.1} parent=0 // pred_check_branch
    %13 = sbr.rel (0) target = $region9
  $region8: #{hand_pose_embedder.1} parent=0 // pred_region
    _
  $region9: #{hand_pose_embedder.1} parent=0 // pred_fallthru
    _
  // Predicated region
  $region10: #{hand_pose_embedder.1} parent=0 // pred_check
    _
  $region11: #{hand_pose_embedder.1} parent=0 // pred_check_branch
    %15 = sbr.rel (0) target = $region13
  $region12: #{hand_pose_embedder.1} parent=0 // pred_region
    _
  $region13: #{hand_pose_embedder.1} parent=0 // pred_fallthru
    _
  // Predicated region
  $region14: #{hand_pose_embedder.1} parent=0 // pred_check
    _
  $region15: #{hand_pose_embedder.1} parent=0 // pred_check_branch
    %17 = sbr.rel (0) target = $region17
  $region16: #{hand_pose_embedder.1} parent=0 // pred_region
    _
  $region17: #{hand_pose_embedder.1} parent=0 // pred_fallthru
    _
  // Predicated region
  $region18: #{hand_pose_embedder.1} parent=0 // pred_check
    _
  $region19: #{hand_pose_embedder.1} parent=0 // pred_check_branch
    %19 = sbr.rel (0) target = $region21
  $region20: #{hand_pose_embedder.1} parent=0 // pred_region
    _
  $region21: #{hand_pose_embedder.1} parent=0 // pred_fallthru
    _
  %v20 = vld [vmem:[%s0] sm:$0x3f]
  %v21 = vld [vmem:[%s1] sm:$0xff]
  %v22 = vld [vmem:[%s1 + $0x8] sm:$0xff]
  %v23 = vld [vmem:[%s1 + $0x10] sm:$0xff]
  %v24 = vld [vmem:[%s1 + $0x18] sm:$0xff]
  %v25 = vld [vmem:[%s1 + $0x20] sm:$0xff]
  %v26 = vld [vmem:[%s1 + $0x28] sm:$0xff]
  %v27 = vld [vmem:[%s1 + $0x30] sm:$0xff]
  %v28 = vld [vmem:[%s1 + $0x38] sm:$0xff]
  %v29 = vld [vmem:[%s1 + $0x40] sm:$0xff]
  %v30 = vld [vmem:[%s1 + $0x48] sm:$0xff]
  %v31 = vld [vmem:[%s1 + $0x50] sm:$0xff]
  %v32 = vld [vmem:[%s1 + $0x58] sm:$0xff]
  %v33 = vld [vmem:[%s1 + $0x60] sm:$0xff]
  %v34 = vld [vmem:[%s1 + $0x68] sm:$0xff]
  %v35 = vld [vmem:[%s1 + $0x70] sm:$0xff]
  %v36 = vld [vmem:[%s1 + $0x78] sm:$0xff]
  %v37 = vld [vmem:[%s1 + $0x80] sm:$0xff]
  %v38 = vld [vmem:[%s1 + $0x88] sm:$0xff]
  %v39 = vld [vmem:[%s1 + $0x90] sm:$0xff]
  %v40 = vld [vmem:[%s1 + $0x98] sm:$0xff]
  %v41 = vld [vmem:[%s1 + $0xa0] sm:$0xff]
  %v42 = vld [vmem:[%s1 + $0xa8] sm:$0xff]
  %v43 = vld [vmem:[%s1 + $0xb0] sm:$0xff]
  %v44 = vld [vmem:[%s1 + $0xb8] sm:$0xff]
  %v45 = vld [vmem:[%s1 + $0xc0] sm:$0xff]
  %v46 = vld [vmem:[%s1 + $0xc8] sm:$0xff]
  %v47 = vld [vmem:[%s1 + $0xd0] sm:$0xff]
  %v48 = vld [vmem:[%s1 + $0xd8] sm:$0xff]
  %v49 = vld [vmem:[%s1 + $0xe0] sm:$0xff]
  %v50 = vld [vmem:[%s1 + $0xe8] sm:$0xff]
  %v51 = vld [vmem:[%s1 + $0xf0] sm:$0xff]
  %v52 = vld [vmem:[%s1 + $0xf8] sm:$0xff]
  %v53 = vld [vmem:[%s1 + $0x100] sm:$0xff]
  %v54 = vld [vmem:[%s1 + $0x108] sm:$0xff]
  %v55 = vld [vmem:[%s1 + $0x110] sm:$0xff]
  %v56 = vld [vmem:[%s1 + $0x118] sm:$0xff]
  %v57 = vld [vmem:[%s1 + $0x120] sm:$0xff]
  %v58 = vld [vmem:[%s1 + $0x128] sm:$0xff]
  %v59 = vld [vmem:[%s1 + $0x130] sm:$0xff]
  %v60 = vld [vmem:[%s1 + $0x138] sm:$0xff]
  %v61 = vld [vmem:[%s1 + $0x140] sm:$0xff]
  %v62 = vld [vmem:[%s1 + $0x148] sm:$0xff]
  %v63 = vld [vmem:[%s1 + $0x150] sm:$0xff]
  %v64 = vld [vmem:[%s1 + $0x158] sm:$0xff]
  %v65 = vld [vmem:[%s1 + $0x160] sm:$0xff]
  %v66 = vld [vmem:[%s1 + $0x168] sm:$0xff]
  %v67 = vld [vmem:[%s1 + $0x170] sm:$0xff]
  %v68 = vld [vmem:[%s1 + $0x178] sm:$0xff]
  %v69 = vld [vmem:[%s1 + $0x180] sm:$0xff]
  %v70 = vld [vmem:[%s1 + $0x188] sm:$0xff]
  %v71 = vld [vmem:[%s1 + $0x190] sm:$0xff]
  %v72 = vld [vmem:[%s1 + $0x198] sm:$0xff]
  %v73 = vld [vmem:[%s1 + $0x1a0] sm:$0xff]
  %v74 = vld [vmem:[%s1 + $0x1a8] sm:$0xff]
  %v75 = vld [vmem:[%s1 + $0x1b0] sm:$0xff]
  %v76 = vld [vmem:[%s1 + $0x1b8] sm:$0xff]
  %v77 = vld [vmem:[%s1 + $0x1c0] sm:$0xff]
  %v78 = vld [vmem:[%s1 + $0x1c8] sm:$0xff]
  %v79 = vld [vmem:[%s1 + $0x1d0] sm:$0xff]
  %v80 = vld [vmem:[%s1 + $0x1d8] sm:$0xff]
  %v81 = vld [vmem:[%s1 + $0x1e0] sm:$0xff]
  %v82 = vld [vmem:[%s1 + $0x1e8] sm:$0xff]
  %v83 = vld [vmem:[%s1 + $0x1f0] sm:$0xff]
  %v84 = vld [vmem:[%s1 + $0x1f8] sm:$0xff]
  %v85 = vld [vmem:[%s1 + $0x200] sm:$0xff]
  %v86 = vld [vmem:[%s1 + $0x208] sm:$0xff]
  %v87 = vld [vmem:[%s1 + $0x210] sm:$0xff]
  %v88 = vld [vmem:[%s1 + $0x218] sm:$0xff]
  %v89 = vld [vmem:[%s1 + $0x220] sm:$0xff]
  %v90 = vld [vmem:[%s1 + $0x228] sm:$0xff]
  %v91 = vld [vmem:[%s1 + $0x230] sm:$0xff]
  %v92 = vld [vmem:[%s1 + $0x238] sm:$0xff]
  %v93 = vld [vmem:[%s1 + $0x240] sm:$0xff]
  %v94 = vld [vmem:[%s1 + $0x248] sm:$0xff]
  %v95 = vld [vmem:[%s1 + $0x250] sm:$0xff]
  %v96 = vld [vmem:[%s1 + $0x258] sm:$0xff]
  %v97 = vld [vmem:[%s1 + $0x260] sm:$0xff]
  %v98 = vld [vmem:[%s1 + $0x268] sm:$0xff]
  %v99 = vld [vmem:[%s1 + $0x270] sm:$0xff]
  %v100 = vld [vmem:[%s1 + $0x278] sm:$0xff]
  %v101 = vld [vmem:[%s1 + $0x280] sm:$0xff]
  %v102 = vld [vmem:[%s1 + $0x288] sm:$0xff]
  %v103 = vld [vmem:[%s1 + $0x290] sm:$0xff]
  %v104 = vld [vmem:[%s1 + $0x298] sm:$0xff]
  %v105 = vld [vmem:[%s1 + $0x2a0] sm:$0xff]
  %v106 = vld [vmem:[%s1 + $0x2a8] sm:$0xff]
  %v107 = vld [vmem:[%s1 + $0x2b0] sm:$0xff]
  %v108 = vld [vmem:[%s1 + $0x2b8] sm:$0xff]
  %v109 = vld [vmem:[%s1 + $0x2c0] sm:$0xff]
  %v110 = vld [vmem:[%s1 + $0x2c8] sm:$0xff]
  %v111 = vld [vmem:[%s1 + $0x2d0] sm:$0xff]
  %v112 = vld [vmem:[%s1 + $0x2d8] sm:$0xff]
  %v113 = vld [vmem:[%s1 + $0x2e0] sm:$0xff]
  %v114 = vld [vmem:[%s1 + $0x2e8] sm:$0xff]
  %v115 = vld [vmem:[%s1 + $0x2f0] sm:$0xff]
  %v116 = vld [vmem:[%s1 + $0x2f8] sm:$0xff]
  %v117 = vld [vmem:[%s2] sm:$0x3]
  %v119 = vlaneseq
  %v120 = vshrl.u32 %v119, 7
  %v121 = vsub.s32 0, %v120
  %v122 = vrot.slane %v117, %v121
  %v123 = vlaneseq
  %v124 = vshrl.u32 %v123, 7
  %v125 = vsub.s32 1, %v124
  %v126 = vrot.slane %v117, %v125
  %v130 = vcombine.high %v20, %v20
  %v132 = vunpack.c.l.s4 1983009808
  %v133 = vunpack.c.0.s8 %v132
  %v134 = vlaneseq
  %v135 = vshrl.u32 %v134, 7
  %v136 = vsub.s32 %v133, %v135
  %v137 = vrot.slane %v20, %v136
  %v139 = vunpack.c.l.s4 1983009808
  %v140 = vunpack.c.0.s8 %v139
  %v141 = vlaneseq
  %v142 = vshrl.u32 %v141, 7
  %v143 = vsub.s32 %v140, %v142
  %v144 = vrot.slane %v130, %v143
  %v145 = vcombine.high %v137, %v137
  %149 = vmatprep.subr.mxu0 %v22
  %150 = vmatpush1.msra.mxu0 %v21
  %151 = vmatprep.subr.mxu0 %v24
  %152 = vmatpush1.msra.mxu0 %v23
  %153 = vmatprep.subr.mxu0 %v26
  %154 = vmatpush1.msra.mxu0 %v25
  %155 = vmatprep.subr.mxu0 %v28
  %156 = vmatpush1.msra.mxu0 %v27
  %157 = vmatprep.subr.mxu0 %v30
  %158 = vmatpush1.msra.mxu0 %v29
  %159 = vmatprep.subr.mxu0 %v32
  %160 = vmatpush1.msra.mxu0 %v31
  %161 = vmatprep.subr.mxu0 %v34
  %162 = vmatpush1.msra.mxu0 %v33
  %163 = vmatprep.subr.mxu0 %v36
  %164 = vmatpush1.msra.mxu0 %v35
  %165 = vmatprep.subr.mxu0 %v38
  %166 = vmatpush1.msra.mxu0 %v37
  %167 = vmatprep.subr.mxu0 %v40
  %168 = vmatpush1.msra.mxu0 %v39
  %169 = vmatprep.subr.mxu0 %v42
  %170 = vmatpush1.msra.mxu0 %v41
  %171 = vmatprep.subr.mxu0 %v44
  %172 = vmatpush1.msra.mxu0 %v43
  %173 = vmatprep.subr.mxu0 %v46
  %174 = vmatpush1.msra.mxu0 %v45
  %175 = vmatprep.subr.mxu0 %v48
  %176 = vmatpush1.msra.mxu0 %v47
  %177 = vmatprep.subr.mxu0 %v50
  %178 = vmatpush1.msra.mxu0 %v49
  %179 = vmatprep.subr.mxu0 %v52
  %180 = vmatpush1.msra.mxu0 %v51
  %181 = vmatprep.subr.mxu0 %v54
  %182 = vmatpush1.msra.mxu0 %v53
  %183 = vmatprep.subr.mxu0 %v56
  %184 = vmatpush1.msra.mxu0 %v55
  %185 = vmatprep.subr.mxu0 %v58
  %186 = vmatpush1.msra.mxu0 %v57
  %187 = vmatprep.subr.mxu0 %v60
  %188 = vmatpush1.msra.mxu0 %v59
  %189 = vmatprep.subr.mxu0 %v62
  %190 = vmatpush1.msra.mxu0 %v61
  %191 = vmatprep.subr.mxu0 %v64
  %192 = vmatpush1.msra.mxu0 %v63
  %193 = vmatprep.subr.mxu0 %v66
  %194 = vmatpush1.msra.mxu0 %v65
  %195 = vmatprep.subr.mxu0 %v68
  %196 = vmatpush1.msra.mxu0 %v67
  %197 = vmatprep.subr.mxu0 %v70
  %198 = vmatpush1.msra.mxu0 %v69
  %199 = vmatprep.subr.mxu0 %v72
  %200 = vmatpush1.msra.mxu0 %v71
  %201 = vmatprep.subr.mxu0 %v74
  %202 = vmatpush1.msra.mxu0 %v73
  %203 = vmatprep.subr.mxu0 %v76
  %204 = vmatpush1.msra.mxu0 %v75
  %205 = vmatprep.subr.mxu0 %v78
  %206 = vmatpush1.msra.mxu0 %v77
  %207 = vmatprep.subr.mxu0 %v80
  %208 = vmatpush1.msra.mxu0 %v79
  %209 = vmatprep.subr.mxu0 %v82
  %210 = vmatpush1.msra.mxu0 %v81
  %211 = vmatprep.subr.mxu0 %v84
  %212 = vmatpush1.msra.mxu0 %v83
  %213 = vmatprep.mubr.f32.mxu0 %v145
  %214 = vmatmul.mubr.f32.gmra.mrb[0].mxu0 %v137
  %v215 = vpop.f32.mrb[0].mxu0
  %v216 = vadd.f32 %v122, %v215
  %v217 = vpop.f32.mrb[0].mxu0
  %v218 = vadd.f32 %v126, %v217
  %219 = vdwg.mxu0
  %220 = vmatprep.subr.mxu0 %v86
  %221 = vmatpush1.msra.mxu0 %v85
  %222 = vmatprep.subr.mxu0 %v88
  %223 = vmatpush1.msra.mxu0 %v87
  %224 = vmatprep.subr.mxu0 %v90
  %225 = vmatpush1.msra.mxu0 %v89
  %226 = vmatprep.subr.mxu0 %v92
  %227 = vmatpush1.msra.mxu0 %v91
  %228 = vmatprep.subr.mxu0 %v94
  %229 = vmatpush1.msra.mxu0 %v93
  %230 = vmatprep.subr.mxu0 %v96
  %231 = vmatpush1.msra.mxu0 %v95
  %232 = vmatprep.subr.mxu0 %v98
  %233 = vmatpush1.msra.mxu0 %v97
  %234 = vmatprep.subr.mxu0 %v100
  %235 = vmatpush1.msra.mxu0 %v99
  %236 = vmatprep.subr.mxu0 %v102
  %237 = vmatpush1.msra.mxu0 %v101
  %238 = vmatprep.subr.mxu0 %v104
  %239 = vmatpush1.msra.mxu0 %v103
  %240 = vmatprep.subr.mxu0 %v106
  %241 = vmatpush1.msra.mxu0 %v105
  %242 = vmatprep.subr.mxu0 %v108
  %243 = vmatpush1.msra.mxu0 %v107
  %244 = vmatprep.subr.mxu0 %v110
  %245 = vmatpush1.msra.mxu0 %v109
  %246 = vmatprep.subr.mxu0 %v112
  %247 = vmatpush1.msra.mxu0 %v111
  %248 = vmatprep.subr.mxu0 %v114
  %249 = vmatpush1.msra.mxu0 %v113
  %250 = vmatprep.subr.mxu0 %v116
  %251 = vmatpush1.msra.mxu0 %v115
  %252 = vmatprep.subr.mxu0 0.0
  %253 = vmatpush1.msra.mxu0 0.0
  %254 = vmatprep.subr.mxu0 0.0
  %255 = vmatpush1.msra.mxu0 0.0
  %256 = vmatprep.subr.mxu0 0.0
  %257 = vmatpush1.msra.mxu0 0.0
  %258 = vmatprep.subr.mxu0 0.0
  %259 = vmatpush1.msra.mxu0 0.0
  %260 = vmatprep.subr.mxu0 0.0
  %261 = vmatpush1.msra.mxu0 0.0
  %262 = vmatprep.subr.mxu0 0.0
  %263 = vmatpush1.msra.mxu0 0.0
  %264 = vmatprep.subr.mxu0 0.0
  %265 = vmatpush1.msra.mxu0 0.0
  %266 = vmatprep.subr.mxu0 0.0
  %267 = vmatpush1.msra.mxu0 0.0
  %268 = vmatprep.subr.mxu0 0.0
  %269 = vmatpush1.msra.mxu0 0.0
  %270 = vmatprep.subr.mxu0 0.0
  %271 = vmatpush1.msra.mxu0 0.0
  %272 = vmatprep.subr.mxu0 0.0
  %273 = vmatpush1.msra.mxu0 0.0
  %274 = vmatprep.subr.mxu0 0.0
  %275 = vmatpush1.msra.mxu0 0.0
  %276 = vmatprep.subr.mxu0 0.0
  %277 = vmatpush1.msra.mxu0 0.0
  %278 = vmatprep.subr.mxu0 0.0
  %279 = vmatpush1.msra.mxu0 0.0
  %280 = vmatprep.subr.mxu0 0.0
  %281 = vmatpush1.msra.mxu0 0.0
  %282 = vmatprep.subr.mxu0 0.0
  %283 = vmatpush1.msra.mxu0 0.0
  %284 = vmatprep.mubr.f32.mxu0 0.0
  %285 = vmatmul.mubr.f32.gmra.mrb[0].mxu0 %v144
  %v286 = vpop.f32.mrb[0].mxu0
  %v287 = vadd.f32 %v216, %v286
  %v288 = vpop.f32.mrb[0].mxu0
  %v289 = vadd.f32 %v218, %v288
  %290 = vdwg.mxu0
  %v291 = vxor.u32 %v287, 2147483648
  %v292 = vxor.u32 %v289, 2147483648
  %v293 = vmul.f32 %v291, 1.442695
  %v294 = vpow.pop %v293
  %v295 = vmul.f32 %v292, 1.442695
  %v296 = vpow.pop %v295
  %v297 = vadd.f32 %v294, 1.0
  %v298 = vadd.f32 %v296, 1.0
  %v299 = vrcp.pop %v297
  %v300 = vmul.f32 1.0, %v299
  %v301 = vrcp.pop %v298
  %v302 = vmul.f32 1.0, %v301
  %v303 = vmul.f32 %v287, %v300
  %v304 = vmul.f32 %v289, %v302
  %v305 = vld [vmem:[%s3] sm:$0xff]
  %v306 = vld [vmem:[%s3 + $0x8] sm:$0xff]
  %v307 = vld [vmem:[%s3 + $0x10] sm:$0xff]
  %v308 = vld [vmem:[%s3 + $0x18] sm:$0xff]
  %v309 = vld [vmem:[%s3 + $0x20] sm:$0xff]
  %v310 = vld [vmem:[%s3 + $0x28] sm:$0xff]
  %v311 = vld [vmem:[%s3 + $0x30] sm:$0xff]
  %v312 = vld [vmem:[%s3 + $0x38] sm:$0xff]
  %v313 = vld [vmem:[%s3 + $0x40] sm:$0xff]
  %v314 = vld [vmem:[%s3 + $0x48] sm:$0xff]
  %v315 = vld [vmem:[%s3 + $0x50] sm:$0xff]
  %v316 = vld [vmem:[%s3 + $0x58] sm:$0xff]
  %v317 = vld [vmem:[%s3 + $0x60] sm:$0xff]
  %v318 = vld [vmem:[%s3 + $0x68] sm:$0xff]
  %v319 = vld [vmem:[%s3 + $0x70] sm:$0xff]
  %v320 = vld [vmem:[%s3 + $0x78] sm:$0xff]
  %v321 = vld [vmem:[%s3 + $0x80] sm:$0xff]
  %v322 = vld [vmem:[%s3 + $0x88] sm:$0xff]
  %v323 = vld [vmem:[%s3 + $0x90] sm:$0xff]
  %v324 = vld [vmem:[%s3 + $0x98] sm:$0xff]
  %v325 = vld [vmem:[%s3 + $0xa0] sm:$0xff]
  %v326 = vld [vmem:[%s3 + $0xa8] sm:$0xff]
  %v327 = vld [vmem:[%s3 + $0xb0] sm:$0xff]
  %v328 = vld [vmem:[%s3 + $0xb8] sm:$0xff]
  %v329 = vld [vmem:[%s3 + $0xc0] sm:$0xff]
  %v330 = vld [vmem:[%s3 + $0xc8] sm:$0xff]
  %v331 = vld [vmem:[%s3 + $0xd0] sm:$0xff]
  %v332 = vld [vmem:[%s3 + $0xd8] sm:$0xff]
  %v333 = vld [vmem:[%s3 + $0xe0] sm:$0xff]
  %v334 = vld [vmem:[%s3 + $0xe8] sm:$0xff]
  %v335 = vld [vmem:[%s3 + $0xf0] sm:$0xff]
  %v336 = vld [vmem:[%s3 + $0xf8] sm:$0xff]
  %v337 = vld [vmem:[%s3 + $0x100] sm:$0xff]
  %v338 = vld [vmem:[%s3 + $0x108] sm:$0xff]
  %v339 = vld [vmem:[%s3 + $0x110] sm:$0xff]
  %v340 = vld [vmem:[%s3 + $0x118] sm:$0xff]
  %v341 = vld [vmem:[%s3 + $0x120] sm:$0xff]
  %v342 = vld [vmem:[%s3 + $0x128] sm:$0xff]
  %v343 = vld [vmem:[%s3 + $0x130] sm:$0xff]
  %v344 = vld [vmem:[%s3 + $0x138] sm:$0xff]
  %v345 = vld [vmem:[%s3 + $0x140] sm:$0xff]
  %v346 = vld [vmem:[%s3 + $0x148] sm:$0xff]
  %v347 = vld [vmem:[%s3 + $0x150] sm:$0xff]
  %v348 = vld [vmem:[%s3 + $0x158] sm:$0xff]
  %v349 = vld [vmem:[%s3 + $0x160] sm:$0xff]
  %v350 = vld [vmem:[%s3 + $0x168] sm:$0xff]
  %v351 = vld [vmem:[%s3 + $0x170] sm:$0xff]
  %v352 = vld [vmem:[%s3 + $0x178] sm:$0xff]
  %v353 = vld [vmem:[%s3 + $0x180] sm:$0xff]
  %v354 = vld [vmem:[%s3 + $0x188] sm:$0xff]
  %v355 = vld [vmem:[%s3 + $0x190] sm:$0xff]
  %v356 = vld [vmem:[%s3 + $0x198] sm:$0xff]
  %v357 = vld [vmem:[%s3 + $0x1a0] sm:$0xff]
  %v358 = vld [vmem:[%s3 + $0x1a8] sm:$0xff]
  %v359 = vld [vmem:[%s3 + $0x1b0] sm:$0xff]
  %v360 = vld [vmem:[%s3 + $0x1b8] sm:$0xff]
  %v361 = vld [vmem:[%s3 + $0x1c0] sm:$0xff]
  %v362 = vld [vmem:[%s3 + $0x1c8] sm:$0xff]
  %v363 = vld [vmem:[%s3 + $0x1d0] sm:$0xff]
  %v364 = vld [vmem:[%s3 + $0x1d8] sm:$0xff]
  %v365 = vld [vmem:[%s3 + $0x1e0] sm:$0xff]
  %v366 = vld [vmem:[%s3 + $0x1e8] sm:$0xff]
  %v367 = vld [vmem:[%s3 + $0x1f0] sm:$0xff]
  %v368 = vld [vmem:[%s3 + $0x1f8] sm:$0xff]
  %v369 = vld [vmem:[%s4] sm:$0x3]
  %v371 = vlaneseq
  %v372 = vshrl.u32 %v371, 7
  %v373 = vsub.s32 0, %v372
  %v374 = vrot.slane %v369, %v373
  %v375 = vlaneseq
  %v376 = vshrl.u32 %v375, 7
  %v377 = vsub.s32 1, %v376
  %v378 = vrot.slane %v369, %v377
  %381 = vmatprep.subr.mxu0 %v306
  %382 = vmatpush1.msra.mxu0 %v305
  %383 = vmatprep.subr.mxu0 %v308
  %384 = vmatpush1.msra.mxu0 %v307
  %385 = vmatprep.subr.mxu0 %v310
  %386 = vmatpush1.msra.mxu0 %v309
  %387 = vmatprep.subr.mxu0 %v312
  %388 = vmatpush1.msra.mxu0 %v311
  %389 = vmatprep.subr.mxu0 %v314
  %390 = vmatpush1.msra.mxu0 %v313
  %391 = vmatprep.subr.mxu0 %v316
  %392 = vmatpush1.msra.mxu0 %v315
  %393 = vmatprep.subr.mxu0 %v318
  %394 = vmatpush1.msra.mxu0 %v317
  %395 = vmatprep.subr.mxu0 %v320
  %396 = vmatpush1.msra.mxu0 %v319
  %397 = vmatprep.subr.mxu0 %v322
  %398 = vmatpush1.msra.mxu0 %v321
  %399 = vmatprep.subr.mxu0 %v324
  %400 = vmatpush1.msra.mxu0 %v323
  %401 = vmatprep.subr.mxu0 %v326
  %402 = vmatpush1.msra.mxu0 %v325
  %403 = vmatprep.subr.mxu0 %v328
  %404 = vmatpush1.msra.mxu0 %v327
  %405 = vmatprep.subr.mxu0 %v330
  %406 = vmatpush1.msra.mxu0 %v329
  %407 = vmatprep.subr.mxu0 %v332
  %408 = vmatpush1.msra.mxu0 %v331
  %409 = vmatprep.subr.mxu0 %v334
  %410 = vmatpush1.msra.mxu0 %v333
  %411 = vmatprep.subr.mxu0 %v336
  %412 = vmatpush1.msra.mxu0 %v335
  %413 = vmatprep.subr.mxu0 %v338
  %414 = vmatpush1.msra.mxu0 %v337
  %415 = vmatprep.subr.mxu0 %v340
  %416 = vmatpush1.msra.mxu0 %v339
  %417 = vmatprep.subr.mxu0 %v342
  %418 = vmatpush1.msra.mxu0 %v341
  %419 = vmatprep.subr.mxu0 %v344
  %420 = vmatpush1.msra.mxu0 %v343
  %421 = vmatprep.subr.mxu0 %v346
  %422 = vmatpush1.msra.mxu0 %v345
  %423 = vmatprep.subr.mxu0 %v348
  %424 = vmatpush1.msra.mxu0 %v347
  %425 = vmatprep.subr.mxu0 %v350
  %426 = vmatpush1.msra.mxu0 %v349
  %427 = vmatprep.subr.mxu0 %v352
  %428 = vmatpush1.msra.mxu0 %v351
  %429 = vmatprep.subr.mxu0 %v354
  %430 = vmatpush1.msra.mxu0 %v353
  %431 = vmatprep.subr.mxu0 %v356
  %432 = vmatpush1.msra.mxu0 %v355
  %433 = vmatprep.subr.mxu0 %v358
  %434 = vmatpush1.msra.mxu0 %v357
  %435 = vmatprep.subr.mxu0 %v360
  %436 = vmatpush1.msra.mxu0 %v359
  %437 = vmatprep.subr.mxu0 %v362
  %438 = vmatpush1.msra.mxu0 %v361
  %439 = vmatprep.subr.mxu0 %v364
  %440 = vmatpush1.msra.mxu0 %v363
  %441 = vmatprep.subr.mxu0 %v366
  %442 = vmatpush1.msra.mxu0 %v365
  %443 = vmatprep.subr.mxu0 %v368
  %444 = vmatpush1.msra.mxu0 %v367
  %445 = vmatprep.mubr.f32.mxu0 %v304
  %446 = vmatmul.mubr.f32.gmra.mrb[0].mxu0 %v303
  %v447 = vpop.f32.mrb[0].mxu0
  %v448 = vadd.f32 %v374, %v447
  %v449 = vpop.f32.mrb[0].mxu0
  %v450 = vadd.f32 %v378, %v449
  %451 = vdwg.mxu0
  %v454 = vcombine.low %v448, %v450
  %v456 = vunpack.c.l.s4 1983009808
  %v457 = vunpack.c.0.s8 %v456
  %v458 = vlaneseq
  %v459 = vshrl.u32 %v458, 7
  %v460 = vsub.s32 %v457, %v459
  %v461 = vrot.slane %v454, %v460
  %463 = vst [vmem:[%s5] sm:$0xf] %v461
  // Predicated region
  $region22: #{hand_pose_embedder.1} parent=0 // pred_check
    _
  $region23: #{hand_pose_embedder.1} parent=0 // pred_check_branch
    %465 = sbr.rel (0) target = $region25
  $region24: #{hand_pose_embedder.1} parent=0 // pred_region
    _
  $region25: #{hand_pose_embedder.1} parent=0 // pred_fallthru
    _
  // Predicated region
  $region26: #{hand_pose_embedder.1} parent=0 // pred_check
    _
  $region27: #{hand_pose_embedder.1} parent=0 // pred_check_branch
    %467 = sbr.rel (0) target = $region29
  $region28: #{hand_pose_embedder.1} parent=0 // pred_region
    _
  $region29: #{hand_pose_embedder.1} parent=0 // pred_fallthru
    _

</llo_original>
